<compile_context>
chip_gen: v5e
topology: v5e:2x2
jax: 0.10.0
libtpu: 0.0.40
codegen_flags: <defaults>
</compile_context>

<pallas_src>
import numpy as np
import jax
import jax.numpy as jnp
from jax import lax
from jax.experimental import pallas as pl
from jax.experimental.pallas import tpu as pltpu


def _ceil_div(a, b):
    return -(-a // b)


def _spatial_softmax_kernel(feat_ref, px_ref, py_ref, out_ref):
    # feat_ref : (TR, N)  feature rows for this grid step (HBM dtype preserved)
    # px_ref   : (1, N)   12 * pos_x            (output affine pre-folded)
    # py_ref   : (1, N)   12 * (pos_y - 1)      (output affine pre-folded)
    # out_ref  : (TR, 2)  [:, 0] = E[x]*12, [:, 1] = (E[y]-1)*12
    f = feat_ref[...].astype(jnp.float32)                  # (TR, N)
    m = jnp.max(f, axis=-1, keepdims=True)                 # (TR, 1) numerics only (cancels)
    e = jnp.exp(f - m)                                     # (TR, N) un-normalized weights (EUP)
    px = px_ref[...]                                       # (1, N)  sublane-broadcast
    py = py_ref[...]
    # Three lane reductions on the VPU/XLU (no MXU -> no precision question,
    # ~7 VALU ops/element, hidden under the HBM stream on all generations).
    s = jnp.sum(e, axis=-1, keepdims=True)                 # (TR, 1) sum(e)
    sx = jnp.sum(e * px, axis=-1, keepdims=True)           # (TR, 1) sum(12*pos_x     * e)
    sy = jnp.sum(e * py, axis=-1, keepdims=True)           # (TR, 1) sum(12*(pos_y-1) * e)
    inv = pl.reciprocal(s, approx=False)                   # exact 1/sum(e) (1e-5 tolerance)
    # Single full-block (TR, 2) store instead of two masked 1-lane stores.
    lane = lax.broadcasted_iota(jnp.int32, (f.shape[0], 2), 1)
    out_ref[...] = jnp.where(lane == 0, sx * inv, sy * inv)


def _make_pos_rows(height, width):
    # Mirrors the PyTorch buffers: np.meshgrid default 'xy' indexing gives
    # (width, height)-shaped grids, flattened to height*width.  The output
    # affine (x*12, (y-1)*12) is folded in here, which is exact because the
    # softmax weights sum to 1.
    n = height * width
    pos_x_np, pos_y_np = np.meshgrid(
        np.linspace(-1.0, 1.0, height), np.linspace(-1.0, 1.0, width)
    )
    px = pos_x_np.reshape(n).astype(np.float32) * np.float32(12.0)
    py = (pos_y_np.reshape(n).astype(np.float32) - np.float32(1.0)) * np.float32(12.0)
    return jnp.asarray(px).reshape(1, n), jnp.asarray(py).reshape(1, n)


def _vmem_limit_bytes():
    # Generation-aware scoped-VMEM budget: v7x has 64 MiB physical VMEM per
    # TensorCore (stay <= 32 MiB scoped); v5e/v6e have 128 MiB (use 64 MiB so
    # streamed blocks can grow).  Unknown device kinds get the conservative
    # budget, which is safe on every generation.
    try:
        kind = jax.devices()[0].device_kind.lower()
    except Exception:
        kind = ""
    if "v7" in kind or "7x" in kind:
        return 32 * 1024 * 1024
    if "v5" in kind or "v6" in kind or "trillium" in kind:
        return 64 * 1024 * 1024
    return 32 * 1024 * 1024


def _choose_row_tile(num_rows, n_lanes, itemsize, vmem_limit):
    # Per-row VMEM footprint per grid step:
    #   2 x streamed HBM-dtype block (double-buffered by the BlockSpec pipeline)
    #   + ~3 f32 (TR, N) intermediates (f, e, one pos-weighted product).
    # Sizing from the *actual* HBM dtype keeps bf16 inputs from silently
    # halving the block, while the f32 terms keep v7x from over-committing
    # its smaller VMEM.
    per_row = n_lanes * (2 * itemsize + 3 * 4)
    budget = int(vmem_limit * 0.6)           # headroom for Mosaic scratch / epilogue
    rows = max(8, (budget // per_row) // 8 * 8)
    if rows >= 256:
        rows = rows // 256 * 256             # keep large tiles on a 256-row boundary
    cap = _ceil_div(num_rows, 8) * 8
    return int(min(rows, cap))


def _balance_row_tile(num_rows, tr):
    # Megacore balance (v7x): a 1-step grid runs on one TensorCore, and a small
    # odd step count leaves one core idle for a slice of the time.  Split into
    # at least 2 (and an even number of) row blocks whenever the row count lets us.
    if num_rows <= 8:
        return tr
    steps = _ceil_div(num_rows, tr)
    if steps == 1 or (steps <= 7 and steps % 2 == 1):
        target = 2 if steps == 1 else steps + 1
        tr = max(8, 8 * _ceil_div(_ceil_div(num_rows, target), 8))
    return tr


def spatial_softmax(feature, height, width, channel):
    """feature: (B, C, H, W) float (NCHW). Returns (B, C, 2) float32 keypoints."""
    B = feature.shape[0]
    assert feature.shape[1] == channel
    assert feature.shape[2] == height and feature.shape[3] == width
    R = B * channel
    N = height * width

    # Free reshape (NCHW is contiguous): no padding, no extra HBM passes.
    # The HBM dtype is preserved (bf16 stays bf16 in HBM); the f32 cast happens
    # on the VMEM tile inside the kernel.
    feat2d = feature.reshape(R, N)

    vmem_limit = _vmem_limit_bytes()
    TR = _choose_row_tile(R, N, feat2d.dtype.itemsize, vmem_limit)
    TR = _balance_row_tile(R, TR)
    grid_steps = _ceil_div(R, TR)

    px, py = _make_pos_rows(height, width)

    # NOTE: for extremely large H*W (where even 8 rows of f32 intermediates
    # would not fit VMEM) the spatial axis would need its own grid dimension
    # with an f32 accumulator; BEV-sized grids never get close to that.
    out = pl.pallas_call(
        _spatial_softmax_kernel,
        out_shape=jax.ShapeDtypeStruct((R, 2), jnp.float32),
        grid_spec=pltpu.PrefetchScalarGridSpec(
            num_scalar_prefetch=0,
            grid=(grid_steps,),
            in_specs=[
                # Streamed feature rows; last dim is the FULL spatial axis so no
                # lane padding is needed; the last row block may be partial.
                pl.BlockSpec((TR, N), lambda i: (i, 0)),
                # Tiny resident constants (a few KB each): 12*pos_x, 12*(pos_y-1).
                pl.BlockSpec((1, N), lambda i: (0, 0)),
                pl.BlockSpec((1, N), lambda i: (0, 0)),
            ],
            out_specs=pl.BlockSpec((TR, 2), lambda i: (i, 0)),
        ),
        compiler_params=pltpu.CompilerParams(
            dimension_semantics=("parallel",),   # row blocks shard across TCs (v7x megacore)
            vmem_limit_bytes=vmem_limit,
        ),
    )(feat2d, px, py)

    return out.reshape(B, channel, 2)


def spatial_softmax_reference(feature, height, width, channel):
    """Pure-JAX reference reproducing the PyTorch forward (temperature = 1.0)."""
    B = feature.shape[0]
    f = feature.reshape(-1, height * width).astype(jnp.float32)
    w = jax.nn.softmax(f, axis=-1)
    pos_x_np, pos_y_np = np.meshgrid(
        np.linspace(-1.0, 1.0, height), np.linspace(-1.0, 1.0, width)
    )
    pos_x = jnp.asarray(pos_x_np.reshape(1, height * width), dtype=jnp.float32)
    pos_y = jnp.asarray(pos_y_np.reshape(1, height * width), dtype=jnp.float32)
    ex = jnp.sum(pos_x * w, axis=1, keepdims=True)
    ey = jnp.sum(pos_y * w, axis=1, keepdims=True)
    kp = jnp.concatenate([ex, ey], axis=1).reshape(B, channel, 2)
    kp = kp.at[:, :, 1].set((kp[:, :, 1] - 1.0) * 12.0)
    kp = kp.at[:, :, 0].set(kp[:, :, 0] * 12.0)
    return kp


if __name__ == "__main__":
    B, C, H, W = 2, 4, 16, 16
    key = jax.random.PRNGKey(0)
    x = jax.random.normal(key, (B, C, H, W), dtype=jnp.float32)

    out = jax.block_until_ready(spatial_softmax(x, H, W, C))

    ref = spatial_softmax_reference(x, H, W, C)
    np.testing.assert_allclose(
        np.asarray(out), np.asarray(ref), rtol=1e-5, atol=1e-5
    )
    print("KERNEL_OK")
</pallas_src>

<mosaic_0001>
module attributes {stable_mosaic.version = 11 : i64} {
  func.func @_spatial_softmax_kernel(%arg0: i32, %arg1: memref<8x256xf32, #tpu.memory_space<vmem>>, %arg2: memref<1x256xf32, #tpu.memory_space<vmem>>, %arg3: memref<1x256xf32, #tpu.memory_space<vmem>>, %arg4: memref<8x2xf32, #tpu.memory_space<vmem>>) attributes {dimension_semantics = [#tpu.dimension_semantics<parallel>], iteration_bounds = array<i64: 1>, scalar_prefetch = 0 : i64, scratch_operands = 0 : i64, tpu.core_type = #tpu.core_type<tc>, window_params = [{transform_indices = @transform_0, window_bounds = array<i64: 8, 256>}, {pipeline_mode = #tpu.pipeline_mode<synchronous>, transform_indices = @transform_1, window_bounds = array<i64: 1, 256>}, {pipeline_mode = #tpu.pipeline_mode<synchronous>, transform_indices = @transform_2, window_bounds = array<i64: 1, 256>}, {transform_indices = @transform_3, window_bounds = array<i64: 8, 2>}]} {
    %c0 = arith.constant 0 : index
    %c0_0 = arith.constant 0 : index
    %0 = vector.load %arg1[%c0, %c0_0] : memref<8x256xf32, #tpu.memory_space<vmem>>, vector<8x256xf32>
    %cst = arith.constant dense<0xFF800000> : vector<8xf32>
    %1 = vector.multi_reduction <maximumf>, %0, %cst [1] : vector<8x256xf32> to vector<8xf32>
    %2 = vector.shape_cast %1 : vector<8xf32> to vector<8x1xf32>
    %3 = vector.broadcast %2 : vector<8x1xf32> to vector<8x256xf32>
    %4 = arith.subf %0, %3 : vector<8x256xf32>
    %5 = math.exp %4 : vector<8x256xf32>
    %c0_1 = arith.constant 0 : index
    %c0_2 = arith.constant 0 : index
    %6 = vector.load %arg2[%c0_1, %c0_2] : memref<1x256xf32, #tpu.memory_space<vmem>>, vector<1x256xf32>
    %c0_3 = arith.constant 0 : index
    %c0_4 = arith.constant 0 : index
    %7 = vector.load %arg3[%c0_3, %c0_4] : memref<1x256xf32, #tpu.memory_space<vmem>>, vector<1x256xf32>
    %cst_5 = arith.constant dense<0.000000e+00> : vector<8xf32>
    %8 = vector.multi_reduction <add>, %5, %cst_5 [1] : vector<8x256xf32> to vector<8xf32>
    %9 = vector.shape_cast %8 : vector<8xf32> to vector<8x1xf32>
    %10 = vector.broadcast %6 : vector<1x256xf32> to vector<8x256xf32>
    %11 = arith.mulf %5, %10 : vector<8x256xf32>
    %cst_6 = arith.constant dense<0.000000e+00> : vector<8xf32>
    %12 = vector.multi_reduction <add>, %11, %cst_6 [1] : vector<8x256xf32> to vector<8xf32>
    %13 = vector.shape_cast %12 : vector<8xf32> to vector<8x1xf32>
    %14 = vector.broadcast %7 : vector<1x256xf32> to vector<8x256xf32>
    %15 = arith.mulf %5, %14 : vector<8x256xf32>
    %cst_7 = arith.constant dense<0.000000e+00> : vector<8xf32>
    %16 = vector.multi_reduction <add>, %15, %cst_7 [1] : vector<8x256xf32> to vector<8xf32>
    %17 = vector.shape_cast %16 : vector<8xf32> to vector<8x1xf32>
    %18 = tpu.reciprocal %9 : vector<8x1xf32> -> vector<8x1xf32>
    %19 = tpu.iota {dimensions = array<i32: 1>} : vector<8x2xi32>
    %c0_i32 = arith.constant 0 : i32
    %20 = vector.broadcast %c0_i32 : i32 to vector<8x2xi32>
    %21 = arith.cmpi eq, %19, %20 : vector<8x2xi32>
    %22 = arith.mulf %13, %18 : vector<8x1xf32>
    %23 = arith.mulf %17, %18 : vector<8x1xf32>
    %24 = vector.shape_cast %22 : vector<8x1xf32> to vector<8x1xf32>
    %25 = vector.broadcast %24 : vector<8x1xf32> to vector<8x2xf32>
    %26 = vector.shape_cast %23 : vector<8x1xf32> to vector<8x1xf32>
    %27 = vector.broadcast %26 : vector<8x1xf32> to vector<8x2xf32>
    %28 = arith.select %21, %25, %27 : vector<8x2xi1>, vector<8x2xf32>
    %c0_8 = arith.constant 0 : index
    %c0_9 = arith.constant 0 : index
    %29 = vector.load %arg4[%c0_8, %c0_9] : memref<8x2xf32, #tpu.memory_space<vmem>>, vector<8x2xf32>
    tpu.vector_store %arg4[%c0_8, %c0_9], %28 {strides = array<i32>} : memref<8x2xf32, #tpu.memory_space<vmem>>, vector<8x2xf32>,
    return
  }
  func.func @transform_0(%arg0: i32) -> (i32, i32) {
    %c0_i32 = arith.constant 0 : i32
    %c0_i32_0 = arith.constant 0 : i32
    return %arg0, %c0_i32 : i32, i32
  }
  func.func @transform_1(%arg0: i32) -> (i32, i32) {
    %c0_i32 = arith.constant 0 : i32
    %c0_i32_0 = arith.constant 0 : i32
    %c0_i32_1 = arith.constant 0 : i32
    return %c0_i32, %c0_i32_0 : i32, i32
  }
  func.func @transform_2(%arg0: i32) -> (i32, i32) {
    %c0_i32 = arith.constant 0 : i32
    %c0_i32_0 = arith.constant 0 : i32
    %c0_i32_1 = arith.constant 0 : i32
    return %c0_i32, %c0_i32_0 : i32, i32
  }
  func.func @transform_3(%arg0: i32) -> (i32, i32) {
    %c0_i32 = arith.constant 0 : i32
    %c0_i32_0 = arith.constant 0 : i32
    return %arg0, %c0_i32 : i32, i32
  }
}

</mosaic_0001>

<llo_original>
// kernel: tpu_custom_call.1
$region0: #{tpu_custom_call.1}
  #allocation0 [shape = 'u32[]', space=smem, size = 0x4, offset = 0x4, fixed_abs, tag = 'smem constant byte address 0x4 - core index']
  #allocation1 [shape = 'u32[72,128]{1,0:T(1,128)}', space=vmem, size = 0x9000, scoped, tag = 'internal scratch']
  %s0 = inlined_call_operand.hbm [shape: f32[8,256], index: 0, kind: input, shape index: {}]
  %s1 = inlined_call_operand.hbm [shape: f32[1,256], index: 1, kind: input, shape index: {}]
  %s2 = inlined_call_operand.hbm [shape: f32[1,256], index: 2, kind: input, shape index: {}]
  %s3 = inlined_call_operand.vmem [shape: f32[8,2], index: 3, kind: output, shape index: {}]
  %s4 = sld [smem:[#allocation0]]
  $region34: #{tpu_custom_call.1} parent=0
    _
  %s6 = ssub.s32 1, %s4
  %s7 = scalar_select 0, %s6, %s4
  $region1: #{tpu_custom_call.1} parent=0
    #allocation2 [shape = 'u8[8192]{0}', space=vmem, size = 0x2000, scoped, tag = 'input window, operand 0, single buffered']
    #allocation3 [shape = 's32[1]{0}', space=sflag, size = 0x4, scoped, tag = 'scoped memory for tpu_custom_call.1']
    #allocation4 [shape = 'u8[1024]{0}', space=vmem, size = 0x400, scoped, tag = 'input window, operand 1, single buffered']
    #allocation5 [shape = 's32[1]{0}', space=sflag, size = 0x4, scoped, tag = 'scoped memory for tpu_custom_call.1']
    #allocation6 [shape = 'u8[1024]{0}', space=vmem, size = 0x400, scoped, tag = 'input window, operand 2, single buffered']
    %8 = vsyncpa [#allocation3], 0
    %9 = vsyncpa [#allocation5], 0
    // Predicated region
    $region2: #{tpu_custom_call.1} parent=1 // pred_check
      _
    $region3: #{tpu_custom_call.1} parent=1 // pred_check_branch
      %11 = sbr.rel (0) target = $region5
    $region4: #{tpu_custom_call.1} parent=1 // pred_region
      %13 = vsyncadd [#allocation3], 0
      %s15 = sshll.u32 %s0, 4
      %s16 = int_to_ptr.hbm [resolvable:$true] %s15
      %s17 = sshll.u32 [#allocation2], 4
      %s18 = int_to_ptr.vmem [resolvable:$true] %s17
      %20 = dma.hbm_to_vmem [thread:$0]  %s16, 256, %s18, [#allocation3]
    $region5: #{tpu_custom_call.1} parent=1 // pred_fallthru
      _
    // Predicated region
    $region6: #{tpu_custom_call.1} parent=1 // pred_check
      _
    $region7: #{tpu_custom_call.1} parent=1 // pred_check_branch
      %22 = sbr.rel (0) target = $region9
    $region8: #{tpu_custom_call.1} parent=1 // pred_region
      %24 = vsyncadd [#allocation5], 0
      %s26 = sshll.u32 %s1, 4
      %s27 = int_to_ptr.hbm [resolvable:$true] %s26
      %s28 = sshll.u32 [#allocation4], 4
      %s29 = int_to_ptr.vmem [resolvable:$true] %s28
      %31 = dma.hbm_to_vmem [thread:$0]  %s27, 32, %s29, [#allocation5]
    $region9: #{tpu_custom_call.1} parent=1 // pred_fallthru
      _
    // Predicated region
    $region10: #{tpu_custom_call.1} parent=1 // pred_check
      _
    $region11: #{tpu_custom_call.1} parent=1 // pred_check_branch
      %33 = sbr.rel (0) target = $region13
    $region12: #{tpu_custom_call.1} parent=1 // pred_region
      %35 = vsyncadd [#allocation5], 0
      %s37 = sshll.u32 %s2, 4
      %s38 = int_to_ptr.hbm [resolvable:$true] %s37
      %s39 = sshll.u32 [#allocation6], 4
      %s40 = int_to_ptr.vmem [resolvable:$true] %s39
      %42 = dma.hbm_to_vmem [thread:$0]  %s38, 32, %s40, [#allocation5]
    $region13: #{tpu_custom_call.1} parent=1 // pred_fallthru
      _
    // Predicated region
    $region14: #{tpu_custom_call.1} parent=1 // pred_check
      _
    $region15: #{tpu_custom_call.1} parent=1 // pred_check_branch
      %44 = sbr.rel (0) target = $region17
    $region16: #{tpu_custom_call.1} parent=1 // pred_region
      %46 = dma.done [#allocation3], 256
    $region17: #{tpu_custom_call.1} parent=1 // pred_fallthru
      _
    // Predicated region
    $region18: #{tpu_custom_call.1} parent=1 // pred_check
      _
    $region19: #{tpu_custom_call.1} parent=1 // pred_check_branch
      %48 = sbr.rel (0) target = $region21
    $region20: #{tpu_custom_call.1} parent=1 // pred_region
      %50 = dma.done [#allocation5], 32
    $region21: #{tpu_custom_call.1} parent=1 // pred_fallthru
      _
    // Predicated region
    $region22: #{tpu_custom_call.1} parent=1 // pred_check
      _
    $region23: #{tpu_custom_call.1} parent=1 // pred_check_branch
      %52 = sbr.rel (0) target = $region25
    $region24: #{tpu_custom_call.1} parent=1 // pred_region
      %54 = dma.done [#allocation5], 32
    $region25: #{tpu_custom_call.1} parent=1 // pred_fallthru
      _
    %v55 = vld [vmem:[#allocation2] sm:$0xff]
    %v56 = vld [vmem:[#allocation2 + $0x8] sm:$0xff]
    %v57 = vmax.f32 %v55, %v56
    %58 = vmax.xlane.f32.xlu0 %v57
    %v59 = vpop.xlane.xlu0 %58
    %v60 = vsub.f32 %v55, %v59
    %v61 = vsub.f32 %v56, %v59
    %v62 = vmul.f32 %v60, 1.442695
    %v63 = vpow.pop %v62
    %v64 = vmul.f32 %v61, 1.442695
    %v65 = vpow.pop %v64
    %v66 = vld [vmem:[#allocation4] sm:$0x3]
    %v67 = vld [vmem:[#allocation6] sm:$0x3]
    %v68 = vadd.f32 %v63, %v65
    %69 = vadd.xlane.f32.xlu0 %v68
    %v70 = vpop.xlane.xlu0 %69
    %v72 = vperm.slane %v66, 0
    %v73 = vperm.slane %v66, 1
    %v76 = vmul.f32 %v63, %v72
    %v77 = vmul.f32 %v65, %v73
    %v78 = vadd.f32 %v76, %v77
    %79 = vadd.xlane.f32.xlu0 %v78
    %v80 = vpop.xlane.xlu0 %79
    %v82 = vperm.slane %v67, 0
    %v83 = vperm.slane %v67, 1
    %v86 = vmul.f32 %v63, %v82
    %v87 = vmul.f32 %v65, %v83
    %v88 = vadd.f32 %v86, %v87
    %89 = vadd.xlane.f32.xlu0 %v88
    %v90 = vpop.xlane.xlu0 %89
    %v91 = vrcp.pop %v70
    %v92 = vmul.f32 %v70, %v91
    %v93 = vsub.f32 1.0, %v92
    %v94 = vmul.f32 %v91, %v93
    %v95 = vadd.f32 %v91, %v94
    %vm96 = vweird.f32 %v70
    %vm97 = vweird.f32 %v91
    %vm98 = vmor %vm96, %vm97
    %v99 = vsel %vm98, %v91, %v95
    %v100 = vand.u32 2147483647, %v70
    %vm101 = vcmp.eq.f32.partialorder %v100, 8.507059e+37
    %v102 = vand.u32 %v70, 2147483648
    %v103 = vor.u32 1.1754944e-38, %v102
    %v104 = vsel %vm101, %v103, %v99
    %v105 = vlaneseq
    %v106 = vand.u32 %v105, 127
    %vm107 = vcmp.eq.s32.totalorder %v106, 0
    %v108 = vmul.f32 %v80, %v104
    %v109 = vmul.f32 %v90, %v104
    %v110 = vsel %vm107, %v108, %v109
    %vm111 = vcmask 15360
    %112 = vst.msk [vmem:[%s3] sm:$0xff] %vm111, %v110
    // Predicated region
    $region26: #{tpu_custom_call.1} parent=1 // pred_check
      _
    $region27: #{tpu_custom_call.1} parent=1 // pred_check_branch
      %114 = sbr.rel (0) target = $region29
    $region28: #{tpu_custom_call.1} parent=1 // pred_region
      _
    $region29: #{tpu_custom_call.1} parent=1 // pred_fallthru
      _
    // Predicated region
    $region30: #{tpu_custom_call.1} parent=1 // pred_check
      _
    $region31: #{tpu_custom_call.1} parent=1 // pred_check_branch
      %116 = sbr.rel (0) target = $region33
    $region32: #{tpu_custom_call.1} parent=1 // pred_region
      _
    $region33: #{tpu_custom_call.1} parent=1 // pred_fallthru
      _
    %117 = vsyncpa [#allocation3], 1
    %118 = vsyncpa [#allocation5], 1

</llo_original>
